<compile_context>
chip_gen: v5e
topology: v5e:2x2
jax: 0.10.0
libtpu: 0.0.40
codegen_flags: <defaults>
</compile_context>

<pallas_src>
import functools

import jax
import jax.numpy as jnp
from jax.experimental import pallas as pl
from jax.experimental.pallas import tpu as pltpu


def fcnet_kernel(x_ref, w1t_ref, b1_ref, w2_ref, b2_ref, o_ref):
    # x_ref:  (TB, D) VMEM (streamed)      w1t_ref: (D, 2) VMEM (resident)
    # b1_ref: (2,) SMEM   w2_ref: (2,) SMEM   b2_ref: (1,) SMEM
    # o_ref:  (TB, 1) VMEM
    # fc1 on the MXU, f32 accumulate (works for f32 or bf16 inputs).
    h = jnp.dot(x_ref[...], w1t_ref[...], preferred_element_type=jnp.float32)  # (TB, 2)
    # Bias + ReLU + fc2 on the VPU (a K=2, N=1 matmul would waste an MXU pop).
    h0 = jnp.maximum(h[:, 0:1] + b1_ref[0], 0.0)  # (TB, 1)
    h1 = jnp.maximum(h[:, 1:2] + b1_ref[1], 0.0)  # (TB, 1)
    y = h0 * w2_ref[0] + h1 * w2_ref[1] + b2_ref[0]
    o_ref[...] = y.astype(o_ref.dtype)


def _round_up(n, m):
    return ((n + m - 1) // m) * m


@functools.partial(jax.jit, static_argnames=("tile_b",))
def fcnet_forward(x, w1, b1, w2, b2, *, tile_b=8192):
    """x: (B, D); PyTorch-layout params w1: (2, D), b1: (2,), w2: (1, 2), b2: (1,).

    Returns (B, 1), matching FcNet.forward.

    Tuning: sweep tile_b in 8192-32768 on v6e/v7x, ~8192 on v5e. For tiny
    batches (B <~ 1024) a plain fused jnp expression is faster than any kernel
    launch; the demo below always exercises the Pallas path.
    """
    B, D = x.shape
    if B < 8:
        # Pad the batch up to one full sublane group (at most 7 junk rows).
        x = jnp.pad(x, ((0, 8 - B), (0, 0)))
    Bp = x.shape[0]

    # Batch tile: multiple of 8 sublanes, never larger than the (padded) batch.
    tb = max(8, min(tile_b, (Bp // 8) * 8))
    # Keep >= 2 grid steps for big batches so "parallel" can shard across the
    # two v7x TensorCores (harmless on single-TC chips).
    if pl.cdiv(Bp, tb) == 1 and Bp >= 2048:
        tb = _round_up(pl.cdiv(Bp, 2), 8)
    grid = (pl.cdiv(Bp, tb),)

    w1t = w1.T                # (D, 2) resident VMEM operand (tiny)
    w2_flat = w2.reshape(-1)  # (2,)

    itemsize = jnp.dtype(x.dtype).itemsize
    cost = pl.CostEstimate(
        flops=4 * B * D + 6 * B,
        bytes_accessed=B * D * itemsize + B * itemsize
        + (w1.size + b1.size + w2.size + b2.size) * 4,
        transcendentals=0,
    )

    # x and out blocks are lane-padded to 128 in VMEM (~tb*512 B each, double
    # buffered); give headroom but stay under v7x's 64 MiB physical VMEM.
    vmem_limit = min(max(4 * tb * 512 + (2 << 20), 16 << 20), 64 << 20)

    out = pl.pallas_call(
        fcnet_kernel,
        out_shape=jax.ShapeDtypeStruct((Bp, 1), x.dtype),
        grid=grid,
        in_specs=[
            pl.BlockSpec((tb, D), lambda i: (i, 0)),              # x tile (streamed)
            pl.BlockSpec((D, 2), lambda i: (0, 0)),               # W1^T (resident)
            pl.BlockSpec(memory_space=pltpu.MemorySpace.SMEM),    # b1 scalars
            pl.BlockSpec(memory_space=pltpu.MemorySpace.SMEM),    # w2 scalars
            pl.BlockSpec(memory_space=pltpu.MemorySpace.SMEM),    # b2 scalar
        ],
        out_specs=pl.BlockSpec((tb, 1), lambda i: (i, 0)),
        compiler_params=pltpu.CompilerParams(
            dimension_semantics=("parallel",),
            vmem_limit_bytes=vmem_limit,
        ),
        cost_estimate=cost,
    )(x, w1t, b1, w2_flat, b2)

    # Drop the (rare, B<8-only) batch padding.
    return out[:B]


def init_fcnet_params(key, x_dim):
    """PyTorch nn.Linear default init, in PyTorch (out, in) weight layout."""
    k1, k2, k3, k4 = jax.random.split(key, 4)
    bound1 = 1.0 / jnp.sqrt(jnp.float32(x_dim))
    bound2 = 1.0 / jnp.sqrt(jnp.float32(2))
    w1 = jax.random.uniform(k1, (2, x_dim), jnp.float32, -bound1, bound1)
    b1 = jax.random.uniform(k2, (2,), jnp.float32, -bound1, bound1)
    w2 = jax.random.uniform(k3, (1, 2), jnp.float32, -bound2, bound2)
    b2 = jax.random.uniform(k4, (1,), jnp.float32, -bound2, bound2)
    return w1, b1, w2, b2


if __name__ == "__main__":
    key = jax.random.PRNGKey(0)
    kx, kx2, kp = jax.random.split(key, 3)

    B, X_DIM = 8, 32
    x = jax.random.normal(kx, (B, X_DIM), jnp.float32)
    w1, b1, w2, b2 = init_fcnet_params(kp, X_DIM)

    def reference(xs):
        # Same math as the PyTorch module (fc1 -> ReLU -> fc2).
        return jnp.maximum(xs @ w1.T + b1, 0.0) @ w2.T + b2

    out = fcnet_forward(x, w1, b1, w2, b2)
    jax.block_until_ready(out)
    assert out.shape == (B, 1), out.shape
    assert jnp.allclose(out, reference(x), atol=1e-5, rtol=1e-5)

    # Ragged-grid check: B not a multiple of 8/128/tile -> multiple grid steps
    # with a masked (out-of-bounds) last output block.
    B2 = 300
    x2 = jax.random.normal(kx2, (B2, X_DIM), jnp.float32)
    out2 = fcnet_forward(x2, w1, b1, w2, b2, tile_b=128)
    jax.block_until_ready(out2)
    assert out2.shape == (B2, 1), out2.shape
    assert jnp.allclose(out2, reference(x2), atol=1e-5, rtol=1e-5)

    print("KERNEL_OK")
</pallas_src>

<mosaic_0001>
module attributes {stable_mosaic.version = 11 : i64} {
  func.func @fcnet_kernel(%arg0: i32, %arg1: memref<8x32xf32, #tpu.memory_space<vmem>>, %arg2: memref<32x2xf32, #tpu.memory_space<vmem>>, %arg3: memref<2xf32, #tpu.memory_space<smem>>, %arg4: memref<2xf32, #tpu.memory_space<smem>>, %arg5: memref<1xf32, #tpu.memory_space<smem>>, %arg6: memref<8x1xf32, #tpu.memory_space<vmem>>) attributes {dimension_semantics = [#tpu.dimension_semantics<parallel>], iteration_bounds = array<i64: 1>, scalar_prefetch = 0 : i64, scratch_operands = 0 : i64, tpu.core_type = #tpu.core_type<tc>, window_params = [{transform_indices = @transform_0, window_bounds = array<i64: 8, 32>}, {pipeline_mode = #tpu.pipeline_mode<synchronous>, transform_indices = @transform_1, window_bounds = array<i64: 32, 2>}, {transform_indices = @transform_2, window_bounds = array<i64: 2>}, {transform_indices = @transform_3, window_bounds = array<i64: 2>}, {transform_indices = @transform_4, window_bounds = array<i64: 1>}, {transform_indices = @transform_5, window_bounds = array<i64: 8, 1>}]} {
    %c0 = arith.constant 0 : index
    %c0_0 = arith.constant 0 : index
    %0 = vector.load %arg1[%c0, %c0_0] : memref<8x32xf32, #tpu.memory_space<vmem>>, vector<8x32xf32>
    %c0_1 = arith.constant 0 : index
    %c0_2 = arith.constant 0 : index
    %1 = vector.load %arg2[%c0_1, %c0_2] : memref<32x2xf32, #tpu.memory_space<vmem>>, vector<32x2xf32>
    %cst = arith.constant dense<0.000000e+00> : vector<8x2xf32>
    %2 = tpu.matmul %0, %1, %cst {dimension_numbers = #tpu.dot_dimension_numbers<[1], [0], [0], [1], [0, 0, 1, 1], [], []>} : vector<8x32xf32>, vector<32x2xf32>, vector<8x2xf32> -> vector<8x2xf32>
    %3 = vector.extract_strided_slice %2 {offsets = [0, 0], sizes = [8, 1], strides = [1, 1]} : vector<8x2xf32> to vector<8x1xf32>
    %c0_3 = arith.constant 0 : index
    %4 = memref.load %arg3[%c0_3] : memref<2xf32, #tpu.memory_space<smem>>
    %5 = vector.broadcast %4 : f32 to vector<8x1xf32>
    %6 = arith.addf %3, %5 : vector<8x1xf32>
    %cst_4 = arith.constant 0.000000e+00 : f32
    %7 = vector.broadcast %cst_4 : f32 to vector<8x1xf32>
    %8 = arith.maximumf %6, %7 : vector<8x1xf32>
    %9 = vector.extract_strided_slice %2 {offsets = [0, 1], sizes = [8, 1], strides = [1, 1]} : vector<8x2xf32> to vector<8x1xf32>
    %c1 = arith.constant 1 : index
    %10 = memref.load %arg3[%c1] : memref<2xf32, #tpu.memory_space<smem>>
    %11 = vector.broadcast %10 : f32 to vector<8x1xf32>
    %12 = arith.addf %9, %11 : vector<8x1xf32>
    %cst_5 = arith.constant 0.000000e+00 : f32
    %13 = vector.broadcast %cst_5 : f32 to vector<8x1xf32>
    %14 = arith.maximumf %12, %13 : vector<8x1xf32>
    %c0_6 = arith.constant 0 : index
    %15 = memref.load %arg4[%c0_6] : memref<2xf32, #tpu.memory_space<smem>>
    %16 = vector.broadcast %15 : f32 to vector<8x1xf32>
    %17 = arith.mulf %8, %16 : vector<8x1xf32>
    %c1_7 = arith.constant 1 : index
    %18 = memref.load %arg4[%c1_7] : memref<2xf32, #tpu.memory_space<smem>>
    %19 = vector.broadcast %18 : f32 to vector<8x1xf32>
    %20 = arith.mulf %14, %19 : vector<8x1xf32>
    %21 = arith.addf %17, %20 : vector<8x1xf32>
    %c0_8 = arith.constant 0 : index
    %22 = memref.load %arg5[%c0_8] : memref<1xf32, #tpu.memory_space<smem>>
    %23 = vector.broadcast %22 : f32 to vector<8x1xf32>
    %24 = arith.addf %21, %23 : vector<8x1xf32>
    %c0_9 = arith.constant 0 : index
    %c0_10 = arith.constant 0 : index
    %25 = vector.load %arg6[%c0_9, %c0_10] : memref<8x1xf32, #tpu.memory_space<vmem>>, vector<8x1xf32>
    tpu.vector_store %arg6[%c0_9, %c0_10], %24 {strides = array<i32>} : memref<8x1xf32, #tpu.memory_space<vmem>>, vector<8x1xf32>,
    return
  }
  func.func @transform_0(%arg0: i32) -> (i32, i32) {
    %c0_i32 = arith.constant 0 : i32
    %c0_i32_0 = arith.constant 0 : i32
    return %arg0, %c0_i32 : i32, i32
  }
  func.func @transform_1(%arg0: i32) -> (i32, i32) {
    %c0_i32 = arith.constant 0 : i32
    %c0_i32_0 = arith.constant 0 : i32
    %c0_i32_1 = arith.constant 0 : i32
    return %c0_i32, %c0_i32_0 : i32, i32
  }
  func.func @transform_2(%arg0: i32) -> i32 {
    %c0_i32 = arith.constant 0 : i32
    %c0_i32_0 = arith.constant 0 : i32
    return %c0_i32 : i32
  }
  func.func @transform_3(%arg0: i32) -> i32 {
    %c0_i32 = arith.constant 0 : i32
    %c0_i32_0 = arith.constant 0 : i32
    return %c0_i32 : i32
  }
  func.func @transform_4(%arg0: i32) -> i32 {
    %c0_i32 = arith.constant 0 : i32
    %c0_i32_0 = arith.constant 0 : i32
    return %c0_i32 : i32
  }
  func.func @transform_5(%arg0: i32) -> (i32, i32) {
    %c0_i32 = arith.constant 0 : i32
    %c0_i32_0 = arith.constant 0 : i32
    return %arg0, %c0_i32 : i32, i32
  }
}

</mosaic_0001>

<llo_original>
// kernel: fcnet_forward.1
$region0: #{fcnet_forward.1}
  #allocation0 [shape = 'u32[]', space=smem, size = 0x4, offset = 0x4, fixed_abs, tag = 'smem constant byte address 0x4 - core index']
  #allocation1 [shape = 'u32[72,128]{1,0:T(1,128)}', space=vmem, size = 0x9000, scoped, tag = 'internal scratch']
  #allocation2 [shape = 'f32[1]{0:T(128)S(6)}', space=smem, size = 0x200, scoped, tag = 'scoped memory for fcnet_forward.1']
  %s0 = inlined_call_operand.vmem [shape: f32[8,32], index: 0, kind: input, shape index: {}]
  %s1 = inlined_call_operand.vmem [shape: f32[32,2], index: 1, kind: input, shape index: {}]
  %s2 = inlined_call_operand.vmem [shape: f32[2], index: 2, kind: input, shape index: {}]
  %s3 = inlined_call_operand.vmem [shape: f32[2], index: 3, kind: input, shape index: {}]
  %s4 = inlined_call_operand.<no memory space> [shape: f32[1], index: 4, kind: input, shape index: {}]
  %s5 = inlined_call_operand.vmem [shape: f32[8,1], index: 5, kind: output, shape index: {}]
  %s6 = sld [smem:[#allocation0]]
  $region38: #{fcnet_forward.1} parent=0
    _
  %s8 = ssub.s32 1, %s6
  %s9 = scalar_select 0, %s8, %s6
  %10 = sst [smem:[#allocation2]] %s4
  $region1: #{fcnet_forward.1} parent=0
    #allocation3 [shape = 'u8[512]{0}', space=smem, size = 0x200, scoped, tag = 'input window, operand 2, single buffered']
    #allocation4 [shape = 's32[1]{0}', space=sflag, size = 0x4, scoped, tag = 'scoped memory for fcnet_forward.1']
    #allocation5 [shape = 'u8[512]{0}', space=smem, size = 0x200, scoped, tag = 'input window, operand 3, single buffered']
    #allocation6 [shape = 's32[1]{0}', space=sflag, size = 0x4, scoped, tag = 'scoped memory for fcnet_forward.1']
    %11 = vsyncpa [#allocation4], 0
    %12 = vsyncpa [#allocation6], 0
    // Predicated region
    $region2: #{fcnet_forward.1} parent=1 // pred_check
      _
    $region3: #{fcnet_forward.1} parent=1 // pred_check_branch
      %14 = sbr.rel (0) target = $region5
    $region4: #{fcnet_forward.1} parent=1 // pred_region
      _
    $region5: #{fcnet_forward.1} parent=1 // pred_fallthru
      _
    // Predicated region
    $region6: #{fcnet_forward.1} parent=1 // pred_check
      _
    $region7: #{fcnet_forward.1} parent=1 // pred_check_branch
      %16 = sbr.rel (0) target = $region9
    $region8: #{fcnet_forward.1} parent=1 // pred_region
      _
    $region9: #{fcnet_forward.1} parent=1 // pred_fallthru
      _
    // Predicated region
    $region10: #{fcnet_forward.1} parent=1 // pred_check
      _
    $region11: #{fcnet_forward.1} parent=1 // pred_check_branch
      %18 = sbr.rel (0) target = $region13
    $region12: #{fcnet_forward.1} parent=1 // pred_region
      %20 = vsyncadd [#allocation4], 0
      %s22 = sshll.u32 %s2, 4
      %s23 = int_to_ptr.vmem [resolvable:$true] %s22
      %25 = dma.vmem_to_smem %s23, 16, [#allocation3], [#allocation4]
    $region13: #{fcnet_forward.1} parent=1 // pred_fallthru
      _
    // Predicated region
    $region14: #{fcnet_forward.1} parent=1 // pred_check
      _
    $region15: #{fcnet_forward.1} parent=1 // pred_check_branch
      %27 = sbr.rel (0) target = $region17
    $region16: #{fcnet_forward.1} parent=1 // pred_region
      %29 = vsyncadd [#allocation6], 0
      %s31 = sshll.u32 %s3, 4
      %s32 = int_to_ptr.vmem [resolvable:$true] %s31
      %34 = dma.vmem_to_smem %s32, 16, [#allocation5], [#allocation6]
    $region17: #{fcnet_forward.1} parent=1 // pred_fallthru
      _
    // Predicated region
    $region18: #{fcnet_forward.1} parent=1 // pred_check
      _
    $region19: #{fcnet_forward.1} parent=1 // pred_check_branch
      %36 = sbr.rel (0) target = $region21
    $region20: #{fcnet_forward.1} parent=1 // pred_region
      _
    $region21: #{fcnet_forward.1} parent=1 // pred_fallthru
      _
    // Predicated region
    $region22: #{fcnet_forward.1} parent=1 // pred_check
      _
    $region23: #{fcnet_forward.1} parent=1 // pred_check_branch
      %38 = sbr.rel (0) target = $region25
    $region24: #{fcnet_forward.1} parent=1 // pred_region
      %40 = dma.done [#allocation4], 16
    $region25: #{fcnet_forward.1} parent=1 // pred_fallthru
      _
    // Predicated region
    $region26: #{fcnet_forward.1} parent=1 // pred_check
      _
    $region27: #{fcnet_forward.1} parent=1 // pred_check_branch
      %42 = sbr.rel (0) target = $region29
    $region28: #{fcnet_forward.1} parent=1 // pred_region
      %44 = dma.done [#allocation6], 16
    $region29: #{fcnet_forward.1} parent=1 // pred_fallthru
      _
    %45 = sfence
    %v46 = vld [vmem:[%s0] sm:$0xff]
    %v47 = vld [vmem:[%s1] sm:$0xff]
    %v48 = vld [vmem:[%s1 + $0x8] sm:$0xff]
    %v49 = vld [vmem:[%s1 + $0x10] sm:$0xff]
    %v50 = vld [vmem:[%s1 + $0x18] sm:$0xff]
    %vm51 = vcmask 261120
    %v53 = vsel %vm51, %v46, 0
    %55 = vmatpush.msra.mxu0 0.0
    %56 = vmatpush.msra.mxu0 0.0
    %57 = vmatpush.msra.mxu0 0.0
    %58 = vmatpush.msra.mxu0 0.0
    %59 = vmatpush.msra.mxu0 0.0
    %60 = vmatpush.msra.mxu0 0.0
    %61 = vmatpush.msra.mxu0 0.0
    %62 = vmatpush.msra.mxu0 0.0
    %63 = vmatpush.msra.mxu0 0.0
    %64 = vmatpush.msra.mxu0 0.0
    %65 = vmatpush.msra.mxu0 0.0
    %66 = vmatpush.msra.mxu0 0.0
    %67 = vmatpush.msra.mxu0 %v50
    %68 = vmatpush.msra.mxu0 %v49
    %69 = vmatpush.msra.mxu0 %v48
    %70 = vmatpush.msra.mxu0 %v47
    %71 = vmatmul.f32.gmra.mxu0 %v53
    %v72 = vpop.f32.mrf.mxu0
    %v73 = vadd.f32 0.0, %v72
    %74 = vdwg.mxu0
    %s75 = sld [smem:[#allocation3]]
    %v76 = vstv %s75
    %v77 = vadd.f32 %v73, %v76
    %v78 = vmax.f32 %v77, 0.0
    %s79 = sld [smem:[#allocation3 + $0x1]]
    %v80 = vstv %s79
    %v81 = vadd.f32 %v73, %v80
    %v82 = vmax.f32 %v81, 0.0
    %s83 = sld [smem:[#allocation5]]
    %v84 = vstv %s83
    %v85 = vmul.f32 %v78, %v84
    %s86 = sld [smem:[#allocation5 + $0x1]]
    %v87 = vstv %s86
    %v88 = vmul.f32 %v82, %v87
    %90 = vrot.lane.b32.xlu0 %v88, 127
    %v91 = vpop.permute.xlu0 %90
    %v93 = vadd.f32 %v85, %v91
    %s94 = sld [smem:[#allocation2]]
    %v95 = vstv %s94
    %v96 = vadd.f32 %v93, %v95
    %vm97 = vcmask 7168
    %98 = vst.msk [vmem:[%s5] sm:$0xff] %vm97, %v96
    // Predicated region
    $region30: #{fcnet_forward.1} parent=1 // pred_check
      _
    $region31: #{fcnet_forward.1} parent=1 // pred_check_branch
      %100 = sbr.rel (0) target = $region33
    $region32: #{fcnet_forward.1} parent=1 // pred_region
      _
    $region33: #{fcnet_forward.1} parent=1 // pred_fallthru
      _
    // Predicated region
    $region34: #{fcnet_forward.1} parent=1 // pred_check
      _
    $region35: #{fcnet_forward.1} parent=1 // pred_check_branch
      %102 = sbr.rel (0) target = $region37
    $region36: #{fcnet_forward.1} parent=1 // pred_region
      _
    $region37: #{fcnet_forward.1} parent=1 // pred_fallthru
      _
    %103 = vsyncpa [#allocation4], 1
    %104 = vsyncpa [#allocation6], 1

</llo_original>
